<compile_context>
chip_gen: v5e
topology: v5e:2x2
jax: 0.10.0
libtpu: 0.0.40
codegen_flags: <defaults>
</compile_context>

<pallas_src>
import functools

import jax
import jax.numpy as jnp
from jax import lax
from jax.experimental import pallas as pl
from jax.experimental.pallas import tpu as pltpu


def _round_up(a: int, m: int) -> int:
    return ((a + m - 1) // m) * m


# --------------------------------------------------------------------------- #
# Path A: whole rows fit in one VMEM block -> one grid axis over row tiles.
# --------------------------------------------------------------------------- #
def _normalize_rows_kernel(x_ref, o_ref, *, n_cols: int):
    x = x_ref[...].astype(jnp.float32)
    n = jnp.float32(n_cols)
    s = jnp.sum(x, axis=-1, keepdims=True)
    ssq = jnp.sum(x * x, axis=-1, keepdims=True)
    mean = s / n
    # torch.Tensor.std() default: unbiased (ddof=1).  n_cols==1 -> inf/NaN,
    # identical to the PyTorch module's behavior.
    var = (ssq - n * mean * mean) / (n - 1.0)
    inv_std = lax.rsqrt(var)
    o_ref[...] = ((x - mean) * inv_std).astype(o_ref.dtype)


# --------------------------------------------------------------------------- #
# Path B: H*W too large for one block -> chunk HW; grid axis k runs two passes
# over the chunks (0..kt-1 accumulate sums, kt..2kt-1 normalize & write).
# --------------------------------------------------------------------------- #
def _normalize_chunked_kernel(x_ref, o_ref, sum_ref, ssq_ref, *,
                              n_cols: int, n_chunks: int, chunk: int):
    k = pl.program_id(1)

    @pl.when(k == 0)
    def _init():
        sum_ref[...] = jnp.zeros_like(sum_ref)
        ssq_ref[...] = jnp.zeros_like(ssq_ref)

    x = x_ref[...].astype(jnp.float32)

    @pl.when(k < n_chunks)                      # pass 1: accumulate sum / sumsq
    def _accumulate():
        xa = x
        if n_cols % chunk != 0:                 # mask the ragged last chunk
            col0 = lax.rem(k, n_chunks) * chunk
            col = col0 + lax.broadcasted_iota(jnp.int32, x.shape, 1)
            xa = jnp.where(col < n_cols, x, 0.0)
        sum_ref[...] += jnp.sum(xa, axis=-1, keepdims=True)
        ssq_ref[...] += jnp.sum(xa * xa, axis=-1, keepdims=True)

    @pl.when(k >= n_chunks)                     # pass 2: normalize & write out
    def _write():
        n = jnp.float32(n_cols)
        mean = sum_ref[...] / n
        var = (ssq_ref[...] - n * mean * mean) / (n - 1.0)
        inv_std = lax.rsqrt(var)
        o_ref[...] = ((x - mean) * inv_std).astype(o_ref.dtype)


def normalize(x: jax.Array, *, block_bytes: int = 2 * 1024 * 1024) -> jax.Array:
    """Per-(batch, channel) spatial normalization; x: (B, C, H, W) -> (B, C, H, W)."""
    b, c, h, w = x.shape
    bn, hw = b * c, h * w
    x2 = x.reshape(bn, hw)

    itemsize = x.dtype.itemsize
    # Sublane packing multiple: 8 for 32-bit, 16 for bf16, 32 for 8-bit dtypes.
    row_mult = max(8, 32 // itemsize)
    row_bytes = hw * itemsize

    if row_mult * row_bytes <= block_bytes:
        # ---------------- Path A: (tr, HW) blocks ---------------- #
        tr = max(row_mult, (block_bytes // row_bytes) // row_mult * row_mult)
        tr = min(tr, _round_up(bn, row_mult))
        # Keep at least 2 grid steps when possible so the "parallel" axis can
        # shard across v7x's two TensorCores.
        if pl.cdiv(bn, tr) < 2 and bn > row_mult:
            tr = max(row_mult, _round_up(pl.cdiv(bn, 2), row_mult))
        grid = (pl.cdiv(bn, tr),)
        blk_bytes = tr * hw * itemsize

        kernel = functools.partial(_normalize_rows_kernel, n_cols=hw)
        grid_spec = pltpu.PrefetchScalarGridSpec(
            num_scalar_prefetch=0,
            grid=grid,
            in_specs=[pl.BlockSpec((tr, hw), lambda i: (i, 0))],
            out_specs=pl.BlockSpec((tr, hw), lambda i: (i, 0)),
        )
        dim_sem = ("parallel",)
        bytes_accessed = 2 * bn * hw * itemsize
        flops = 6 * bn * hw
    else:
        # ---------------- Path B: (tr, hc) blocks, HW chunked ---------------- #
        tr = row_mult
        hc = max(128, (block_bytes // (tr * itemsize)) // 128 * 128)
        hc = min(hc, _round_up(hw, 128))
        kt = pl.cdiv(hw, hc)
        grid = (pl.cdiv(bn, tr), 2 * kt)
        blk_bytes = tr * hc * itemsize

        kernel = functools.partial(_normalize_chunked_kernel,
                                   n_cols=hw, n_chunks=kt, chunk=hc)
        grid_spec = pltpu.PrefetchScalarGridSpec(
            num_scalar_prefetch=0,
            grid=grid,
            in_specs=[pl.BlockSpec((tr, hc), lambda i, k: (i, lax.rem(k, kt)))],
            # Pass 1 parks the output on chunk 0 (never flushed with garbage);
            # pass 2 (k >= kt) walks the chunks and writes the real data.
            out_specs=pl.BlockSpec((tr, hc),
                                   lambda i, k: (i, jnp.maximum(k - kt, 0))),
            scratch_shapes=[pltpu.VMEM((tr, 1), jnp.float32),
                            pltpu.VMEM((tr, 1), jnp.float32)],
        )
        dim_sem = ("parallel", "arbitrary")
        bytes_accessed = 3 * bn * hw * itemsize   # data read twice + written once
        flops = 7 * bn * hw

    # in + out, double-buffered, plus headroom; capped so it is valid on v7x's
    # 64 MiB physical VMEM and above the 16 MiB v5e scoped default.
    vmem_limit = int(min(64 << 20, max(16 << 20, 6 * blk_bytes)))

    out = pl.pallas_call(
        kernel,
        out_shape=jax.ShapeDtypeStruct((bn, hw), x.dtype),
        grid_spec=grid_spec,
        compiler_params=pltpu.CompilerParams(
            dimension_semantics=dim_sem,
            vmem_limit_bytes=vmem_limit,
        ),
        cost_estimate=pl.CostEstimate(
            flops=int(flops),
            transcendentals=int(bn),
            bytes_accessed=int(bytes_accessed),
        ),
    )(x2)

    return out.reshape(b, c, h, w)


def _reference(x: jax.Array) -> jax.Array:
    b, c, h, w = x.shape
    x2 = x.reshape(b, c, -1).astype(jnp.float32)
    mean = x2.mean(axis=2, keepdims=True)
    std = jnp.sqrt(jnp.sum((x2 - mean) ** 2, axis=2, keepdims=True) / (h * w - 1))
    return ((x2 - mean) / std).reshape(b, c, h, w).astype(x.dtype)


if __name__ == "__main__":
    key = jax.random.PRNGKey(0)
    # Small shape consistent with the module's NCHW forward.
    x = jax.random.normal(key, (2, 4, 16, 16), dtype=jnp.float32) * 3.0 + 1.5

    y = normalize(x)
    jax.block_until_ready(y)
    y_ref = _reference(x)
    assert y.shape == x.shape and y.dtype == x.dtype
    assert jnp.allclose(y, y_ref, atol=1e-4, rtol=1e-4), "mismatch vs reference (path A)"

    # Also exercise the HW-chunked accumulator path by forcing a tiny block budget.
    x2 = jax.random.normal(jax.random.PRNGKey(1), (2, 4, 32, 32), dtype=jnp.float32) * 2.0 - 0.5
    y2 = normalize(x2, block_bytes=8 * 1024)   # forces tr=8, hc=256, 4 HW chunks
    jax.block_until_ready(y2)
    assert jnp.allclose(y2, _reference(x2), atol=1e-4, rtol=1e-4), "mismatch vs reference (path B)"

    print("KERNEL_OK")
</pallas_src>

<mosaic_0001>
module attributes {stable_mosaic.version = 11 : i64} {
  func.func @_normalize_rows_kernel(%arg0: i32, %arg1: memref<8x256xf32, #tpu.memory_space<vmem>>, %arg2: memref<8x256xf32, #tpu.memory_space<vmem>>) attributes {dimension_semantics = [#tpu.dimension_semantics<parallel>], iteration_bounds = array<i64: 1>, scalar_prefetch = 0 : i64, scratch_operands = 0 : i64, tpu.core_type = #tpu.core_type<tc>, window_params = [{transform_indices = @transform_0, window_bounds = array<i64: 8, 256>}, {transform_indices = @transform_1, window_bounds = array<i64: 8, 256>}]} {
    %c0 = arith.constant 0 : index
    %c0_0 = arith.constant 0 : index
    %0 = vector.load %arg1[%c0, %c0_0] : memref<8x256xf32, #tpu.memory_space<vmem>>, vector<8x256xf32>
    %cst = arith.constant dense<0.000000e+00> : vector<8xf32>
    %1 = vector.multi_reduction <add>, %0, %cst [1] : vector<8x256xf32> to vector<8xf32>
    %2 = vector.shape_cast %1 : vector<8xf32> to vector<8x1xf32>
    %3 = arith.mulf %0, %0 : vector<8x256xf32>
    %cst_1 = arith.constant dense<0.000000e+00> : vector<8xf32>
    %4 = vector.multi_reduction <add>, %3, %cst_1 [1] : vector<8x256xf32> to vector<8xf32>
    %5 = vector.shape_cast %4 : vector<8xf32> to vector<8x1xf32>
    %cst_2 = arith.constant 2.560000e+02 : f32
    %6 = vector.broadcast %cst_2 : f32 to vector<8x1xf32>
    %7 = arith.divf %2, %6 : vector<8x1xf32>
    %cst_3 = arith.constant 2.560000e+02 : f32
    %8 = vector.broadcast %cst_3 : f32 to vector<8x1xf32>
    %9 = arith.mulf %8, %7 : vector<8x1xf32>
    %10 = arith.mulf %9, %7 : vector<8x1xf32>
    %11 = arith.subf %5, %10 : vector<8x1xf32>
    %cst_4 = arith.constant 2.560000e+02 : f32
    %cst_5 = arith.constant 1.000000e+00 : f32
    %12 = arith.subf %cst_4, %cst_5 : f32
    %13 = vector.broadcast %12 : f32 to vector<8x1xf32>
    %14 = arith.divf %11, %13 : vector<8x1xf32>
    %15 = math.rsqrt %14 : vector<8x1xf32>
    %16 = vector.broadcast %7 : vector<8x1xf32> to vector<8x256xf32>
    %17 = arith.subf %0, %16 : vector<8x256xf32>
    %18 = vector.broadcast %15 : vector<8x1xf32> to vector<8x256xf32>
    %19 = arith.mulf %17, %18 : vector<8x256xf32>
    %c0_6 = arith.constant 0 : index
    %c0_7 = arith.constant 0 : index
    %20 = vector.load %arg2[%c0_6, %c0_7] : memref<8x256xf32, #tpu.memory_space<vmem>>, vector<8x256xf32>
    tpu.vector_store %arg2[%c0_6, %c0_7], %19 {strides = array<i32>} : memref<8x256xf32, #tpu.memory_space<vmem>>, vector<8x256xf32>,
    return
  }
  func.func @transform_0(%arg0: i32) -> (i32, i32) {
    %c0_i32 = arith.constant 0 : i32
    %c0_i32_0 = arith.constant 0 : i32
    return %arg0, %c0_i32 : i32, i32
  }
  func.func @transform_1(%arg0: i32) -> (i32, i32) {
    %c0_i32 = arith.constant 0 : i32
    %c0_i32_0 = arith.constant 0 : i32
    return %arg0, %c0_i32 : i32, i32
  }
}

</mosaic_0001>

<llo_original>
// kernel: tpu_custom_call.1
$region0: #{tpu_custom_call.1}
  #allocation0 [shape = 'u32[]', space=smem, size = 0x4, offset = 0x4, fixed_abs, tag = 'smem constant byte address 0x4 - core index']
  #allocation1 [shape = 'u32[72,128]{1,0:T(1,128)}', space=vmem, size = 0x9000, scoped, tag = 'internal scratch']
  %s0 = inlined_call_operand.hbm [shape: f32[8,256], index: 0, kind: input, shape index: {}]
  %s1 = inlined_call_operand.hbm [shape: f32[8,256], index: 1, kind: output, shape index: {}]
  %s2 = sld [smem:[#allocation0]]
  $region18: #{tpu_custom_call.1} parent=0
    _
  %s4 = ssub.s32 1, %s2
  %s5 = scalar_select 0, %s4, %s2
  $region1: #{tpu_custom_call.1} parent=0
    #allocation2 [shape = 'u8[8192]{0}', space=vmem, size = 0x2000, scoped, tag = 'input window, operand 0, single buffered']
    #allocation3 [shape = 's32[1]{0}', space=sflag, size = 0x4, scoped, tag = 'scoped memory for tpu_custom_call.1']
    #allocation4 [shape = 's32[1]{0}', space=sflag, size = 0x4, scoped, tag = 'scoped memory for tpu_custom_call.1']
    #allocation5 [shape = 'u8[8192]{0}', space=vmem, size = 0x2000, scoped, tag = 'output window, operand 0, single buffered']
    %6 = vsyncpa [#allocation3], 0
    %7 = vsyncpa [#allocation4], 0
    // Predicated region
    $region2: #{tpu_custom_call.1} parent=1 // pred_check
      _
    $region3: #{tpu_custom_call.1} parent=1 // pred_check_branch
      %9 = sbr.rel (0) target = $region5
    $region4: #{tpu_custom_call.1} parent=1 // pred_region
      %11 = vsyncadd [#allocation3], 0
      %s13 = sshll.u32 %s0, 4
      %s14 = int_to_ptr.hbm [resolvable:$true] %s13
      %s15 = sshll.u32 [#allocation2], 4
      %s16 = int_to_ptr.vmem [resolvable:$true] %s15
      %18 = dma.hbm_to_vmem [thread:$0]  %s14, 256, %s16, [#allocation3]
    $region5: #{tpu_custom_call.1} parent=1 // pred_fallthru
      _
    // Predicated region
    $region6: #{tpu_custom_call.1} parent=1 // pred_check
      _
    $region7: #{tpu_custom_call.1} parent=1 // pred_check_branch
      %20 = sbr.rel (0) target = $region9
    $region8: #{tpu_custom_call.1} parent=1 // pred_region
      %22 = dma.done [#allocation3], 256
    $region9: #{tpu_custom_call.1} parent=1 // pred_fallthru
      _
    %v23 = vld [vmem:[#allocation2] sm:$0xff]
    %v24 = vld [vmem:[#allocation2 + $0x8] sm:$0xff]
    %v25 = vadd.f32 %v23, %v24
    %26 = vadd.xlane.f32.xlu0 %v25
    %v27 = vpop.xlane.xlu0 %26
    %v28 = vmul.f32 %v23, %v23
    %v29 = vmul.f32 %v24, %v24
    %v30 = vadd.f32 %v28, %v29
    %31 = vadd.xlane.f32.xlu0 %v30
    %v32 = vpop.xlane.xlu0 %31
    %v33 = vrcp.pop 256.0
    %v34 = vmul.f32 256.0, %v33
    %v35 = vsub.f32 1.0, %v34
    %v36 = vmul.f32 %v33, %v35
    %v37 = vadd.f32 %v33, %v36
    %vm38 = vweird.f32 %v33
    %v39 = vsel %vm38, %v33, %v37
    %v40 = vmul.f32 %v27, %v39
    %v41 = vmul.f32 %v40, 256.0
    %v42 = vmul.f32 %v41, %v40
    %v43 = vsub.f32 %v32, %v42
    %v44 = vrcp.pop 255.0
    %v45 = vmul.f32 255.0, %v44
    %v46 = vsub.f32 1.0, %v45
    %v47 = vmul.f32 %v44, %v46
    %v48 = vadd.f32 %v44, %v47
    %vm49 = vweird.f32 %v44
    %v50 = vsel %vm49, %v44, %v48
    %v51 = vmul.f32 %v43, %v50
    %v52 = vrsqrt.pop %v51
    %v53 = vmul.f32 %v52, %v51
    %v54 = vmul.f32 %v53, %v52
    %v55 = vmul.f32 0.5, %v54
    %v56 = vsub.f32 1.5, %v55
    %v57 = vmul.f32 %v52, %v56
    %vm58 = vweird.f32 %v51
    %vm59 = vweird.f32 %v52
    %vm60 = vmor %vm58, %vm59
    %v61 = vsel %vm60, %v52, %v57
    %v62 = vsub.f32 %v23, %v40
    %v63 = vsub.f32 %v24, %v40
    %v64 = vmul.f32 %v62, %v61
    %v65 = vmul.f32 %v63, %v61
    %66 = vst [vmem:[#allocation5] sm:$0xff] %v64
    %67 = vst [vmem:[#allocation5 + $0x8] sm:$0xff] %v65
    // Predicated region
    $region10: #{tpu_custom_call.1} parent=1 // pred_check
      _
    $region11: #{tpu_custom_call.1} parent=1 // pred_check_branch
      %69 = sbr.rel (0) target = $region13
    $region12: #{tpu_custom_call.1} parent=1 // pred_region
      %71 = vsyncadd [#allocation4], 0
      %s73 = sshll.u32 [#allocation5], 4
      %s74 = int_to_ptr.vmem [resolvable:$true] %s73
      %s75 = sshll.u32 %s1, 4
      %s76 = int_to_ptr.hbm [resolvable:$true] %s75
      %78 = dma.vmem_to_hbm [thread:$0]  %s74, 256, %s76, [#allocation4]
    $region13: #{tpu_custom_call.1} parent=1 // pred_fallthru
      _
    // Predicated region
    $region14: #{tpu_custom_call.1} parent=1 // pred_check
      _
    $region15: #{tpu_custom_call.1} parent=1 // pred_check_branch
      %80 = sbr.rel (0) target = $region17
    $region16: #{tpu_custom_call.1} parent=1 // pred_region
      %82 = dma.done [#allocation4], 256
    $region17: #{tpu_custom_call.1} parent=1 // pred_fallthru
      _
    %83 = vsyncpa [#allocation3], 1
    %84 = vsyncpa [#allocation4], 1

</llo_original>
